<compile_context>
chip_gen: v5e
topology: v5e:2x2
jax: 0.10.0
libtpu: 0.0.40
codegen_flags: <defaults>
</compile_context>

<pallas_src>
import jax
import jax.numpy as jnp
from jax.experimental import pallas as pl
from jax.experimental.pallas import tpu as pltpu

N_USERS = 63979
N_JOKES = 151
K = 2
LANE = 128
MAX_BLOCK_ROWS = 1024   # 1024 rows * 128 lanes * 4 B = 0.5 MiB per slab row-block
MIN_ROWS_FOR_SPLIT = 16  # force >=2 grid steps (v7x dual-TC) only for larger batches


def _round_up(x, m):
    return ((x + m - 1) // m) * m


def mf_kernel(u_ref, j_ref, out_ref):
    # u_ref, j_ref : (K+1, block_r, 128) f32 VMEM
    #   rows 0..K-1 : embedding components (batch laid out on sublanes+lanes)
    #   row  K      : bias row (joke bias row already includes global_bias)
    # out_ref      : (block_r, 128) f32 VMEM
    kp1 = u_ref.shape[0]
    acc = u_ref[kp1 - 1] + j_ref[kp1 - 1]          # user_bias + (joke_bias + global_bias)
    for kk in range(kp1 - 1):                      # K is static (=2): unrolled VPU FMAs
        acc = acc + u_ref[kk] * j_ref[kk]
    out_ref[...] = acc


def init_params(key, k=K):
    k0, k1, k2, k3, k4 = jax.random.split(key, 5)
    user_lut = jax.random.normal(k0, (N_USERS, k), dtype=jnp.float32)
    joke_lut = jax.random.normal(k1, (N_JOKES, k), dtype=jnp.float32)
    user_bias = jax.random.normal(k2, (N_USERS, 1), dtype=jnp.float32)
    joke_bias = jax.random.normal(k3, (N_JOKES, 1), dtype=jnp.float32)
    global_bias = jax.random.normal(k4, (1,), dtype=jnp.float32)
    return user_lut, joke_lut, user_bias, joke_bias, global_bias


def prepare_tables(params):
    """One-time re-layout: (K+1, N) fused, transposed tables; global bias baked in."""
    user_lut, joke_lut, user_bias, joke_bias, global_bias = params
    user_tab = jnp.concatenate([user_lut.T, user_bias.T], axis=0)                # (K+1, N_USERS)
    joke_tab = jnp.concatenate([joke_lut.T, joke_bias.T + global_bias], axis=0)  # (K+1, N_JOKES)
    return user_tab, joke_tab


def model_forward(tables, users, jokes):
    user_tab, joke_tab = tables
    kp1 = user_tab.shape[0]
    B = users.shape[0]

    # TODO(synk): the embedding gathers stay in plain JAX — a general in-kernel
    # dynamic row/column gather from a 64K-entry table has no clean Pallas
    # vector equivalent; only the dot + bias arithmetic is fused in the kernel.
    uv = user_tab[:, users]   # (K+1, B) single fused gather per side
    jv = joke_tab[:, jokes]   # (K+1, B)

    # Lane-dense layout: batch -> (R_pad, 128) slabs, K+1 as a tiny leading axis.
    R = pl.cdiv(B, LANE)
    num_blocks = max(1, pl.cdiv(R, MAX_BLOCK_ROWS))
    if R >= MIN_ROWS_FOR_SPLIT and num_blocks < 2:
        num_blocks = 2        # give v7x's 2 TensorCores something to split
    block_r = _round_up(pl.cdiv(R, num_blocks), 8)   # <= MAX_BLOCK_ROWS by construction
    R_pad = _round_up(R, block_r)
    B_pad = R_pad * LANE
    pad = B_pad - B

    uv_p = jnp.pad(uv, ((0, 0), (0, pad))).reshape(kp1, R_pad, LANE)
    jv_p = jnp.pad(jv, ((0, 0), (0, pad))).reshape(kp1, R_pad, LANE)

    grid = (R_pad // block_r,)

    out = pl.pallas_call(
        mf_kernel,
        out_shape=jax.ShapeDtypeStruct((R_pad, LANE), jnp.float32),
        grid=grid,
        in_specs=[
            pl.BlockSpec((kp1, block_r, LANE), lambda i: (0, i, 0)),  # user slab
            pl.BlockSpec((kp1, block_r, LANE), lambda i: (0, i, 0)),  # joke slab
        ],
        out_specs=pl.BlockSpec((block_r, LANE), lambda i: (i, 0)),
        compiler_params=pltpu.CompilerParams(
            dimension_semantics=("parallel",)),
        cost_estimate=pl.CostEstimate(
            flops=(2 * (kp1 - 1) + 1) * B_pad,
            transcendentals=0,
            bytes_accessed=(2 * kp1 + 1) * 4 * B_pad),
    )(uv_p, jv_p)

    # Zero-padded tail lanes produce zeros; slice them off.
    return out.reshape(-1)[:B]  # (B,), matches torch .squeeze()


def model_forward_ref(params, users, jokes):
    user_lut, joke_lut, user_bias, joke_bias, global_bias = params
    uv = user_lut[users]
    jv = joke_lut[jokes]
    ub = user_bias[users][:, 0]
    jb = joke_bias[jokes][:, 0]
    return jnp.sum(uv * jv, axis=-1) + ub + jb + global_bias[0]


if __name__ == "__main__":
    key = jax.random.PRNGKey(0)
    pkey, ukey, jkey, ukey2, jkey2 = jax.random.split(key, 5)
    params = init_params(pkey)
    tables = prepare_tables(params)

    fwd = jax.jit(model_forward)

    # Small demo batch.
    B = 8
    users = jax.random.randint(ukey, (B,), 0, N_USERS, dtype=jnp.int32)
    jokes = jax.random.randint(jkey, (B,), 0, N_JOKES, dtype=jnp.int32)
    out = jax.block_until_ready(fwd(tables, users, jokes))
    ref = model_forward_ref(params, users, jokes)
    assert out.shape == (B,)
    assert jnp.allclose(out, ref, atol=1e-5, rtol=1e-5), (out, ref)

    # Moderate batch exercising the multi-step (2-block) grid path.
    B2 = 2048 + 37
    users2 = jax.random.randint(ukey2, (B2,), 0, N_USERS, dtype=jnp.int32)
    jokes2 = jax.random.randint(jkey2, (B2,), 0, N_JOKES, dtype=jnp.int32)
    out2 = jax.block_until_ready(fwd(tables, users2, jokes2))
    ref2 = model_forward_ref(params, users2, jokes2)
    assert out2.shape == (B2,)
    assert jnp.allclose(out2, ref2, atol=1e-5, rtol=1e-5)

    print("KERNEL_OK")
</pallas_src>

<mosaic_0001>
module attributes {stable_mosaic.version = 11 : i64} {
  func.func @mf_kernel(%arg0: i32, %arg1: memref<3x8x128xf32, #tpu.memory_space<vmem>>, %arg2: memref<3x8x128xf32, #tpu.memory_space<vmem>>, %arg3: memref<8x128xf32, #tpu.memory_space<vmem>>) attributes {dimension_semantics = [#tpu.dimension_semantics<parallel>], iteration_bounds = array<i64: 1>, scalar_prefetch = 0 : i64, scratch_operands = 0 : i64, tpu.core_type = #tpu.core_type<tc>, window_params = [{transform_indices = @transform_0, window_bounds = array<i64: 3, 8, 128>}, {transform_indices = @transform_1, window_bounds = array<i64: 3, 8, 128>}, {transform_indices = @transform_2, window_bounds = array<i64: 8, 128>}]} {
    %c2 = arith.constant 2 : index
    %c0 = arith.constant 0 : index
    %c0_0 = arith.constant 0 : index
    %0 = vector.load %arg1[%c2, %c0, %c0_0] : memref<3x8x128xf32, #tpu.memory_space<vmem>>, vector<1x8x128xf32>
    %1 = vector.shape_cast %0 : vector<1x8x128xf32> to vector<8x128xf32>
    %c2_1 = arith.constant 2 : index
    %c0_2 = arith.constant 0 : index
    %c0_3 = arith.constant 0 : index
    %2 = vector.load %arg2[%c2_1, %c0_2, %c0_3] : memref<3x8x128xf32, #tpu.memory_space<vmem>>, vector<1x8x128xf32>
    %3 = vector.shape_cast %2 : vector<1x8x128xf32> to vector<8x128xf32>
    %4 = arith.addf %1, %3 : vector<8x128xf32>
    %c0_4 = arith.constant 0 : index
    %c0_5 = arith.constant 0 : index
    %c0_6 = arith.constant 0 : index
    %5 = vector.load %arg1[%c0_4, %c0_5, %c0_6] : memref<3x8x128xf32, #tpu.memory_space<vmem>>, vector<1x8x128xf32>
    %6 = vector.shape_cast %5 : vector<1x8x128xf32> to vector<8x128xf32>
    %c0_7 = arith.constant 0 : index
    %c0_8 = arith.constant 0 : index
    %c0_9 = arith.constant 0 : index
    %7 = vector.load %arg2[%c0_7, %c0_8, %c0_9] : memref<3x8x128xf32, #tpu.memory_space<vmem>>, vector<1x8x128xf32>
    %8 = vector.shape_cast %7 : vector<1x8x128xf32> to vector<8x128xf32>
    %9 = arith.mulf %6, %8 : vector<8x128xf32>
    %10 = arith.addf %4, %9 : vector<8x128xf32>
    %c1 = arith.constant 1 : index
    %c0_10 = arith.constant 0 : index
    %c0_11 = arith.constant 0 : index
    %11 = vector.load %arg1[%c1, %c0_10, %c0_11] : memref<3x8x128xf32, #tpu.memory_space<vmem>>, vector<1x8x128xf32>
    %12 = vector.shape_cast %11 : vector<1x8x128xf32> to vector<8x128xf32>
    %c1_12 = arith.constant 1 : index
    %c0_13 = arith.constant 0 : index
    %c0_14 = arith.constant 0 : index
    %13 = vector.load %arg2[%c1_12, %c0_13, %c0_14] : memref<3x8x128xf32, #tpu.memory_space<vmem>>, vector<1x8x128xf32>
    %14 = vector.shape_cast %13 : vector<1x8x128xf32> to vector<8x128xf32>
    %15 = arith.mulf %12, %14 : vector<8x128xf32>
    %16 = arith.addf %10, %15 : vector<8x128xf32>
    %c0_15 = arith.constant 0 : index
    %c0_16 = arith.constant 0 : index
    %17 = vector.load %arg3[%c0_15, %c0_16] : memref<8x128xf32, #tpu.memory_space<vmem>>, vector<8x128xf32>
    tpu.vector_store %arg3[%c0_15, %c0_16], %16 {strides = array<i32>} : memref<8x128xf32, #tpu.memory_space<vmem>>, vector<8x128xf32>,
    return
  }
  func.func @transform_0(%arg0: i32) -> (i32, i32, i32) {
    %c0_i32 = arith.constant 0 : i32
    %c0_i32_0 = arith.constant 0 : i32
    %c0_i32_1 = arith.constant 0 : i32
    return %c0_i32, %arg0, %c0_i32_0 : i32, i32, i32
  }
  func.func @transform_1(%arg0: i32) -> (i32, i32, i32) {
    %c0_i32 = arith.constant 0 : i32
    %c0_i32_0 = arith.constant 0 : i32
    %c0_i32_1 = arith.constant 0 : i32
    return %c0_i32, %arg0, %c0_i32_0 : i32, i32, i32
  }
  func.func @transform_2(%arg0: i32) -> (i32, i32) {
    %c0_i32 = arith.constant 0 : i32
    %c0_i32_0 = arith.constant 0 : i32
    return %arg0, %c0_i32 : i32, i32
  }
}

</mosaic_0001>

<llo_original>
// kernel: model_forward.1
$region0: #{model_forward.1}
  #allocation0 [shape = 'u32[]', space=smem, size = 0x4, offset = 0x4, fixed_abs, tag = 'smem constant byte address 0x4 - core index']
  #allocation1 [shape = 'u32[72,128]{1,0:T(1,128)}', space=vmem, size = 0x9000, scoped, tag = 'internal scratch']
  %s0 = inlined_call_operand.vmem [shape: f32[3,8,128], index: 0, kind: input, shape index: {}]
  %s1 = inlined_call_operand.vmem [shape: f32[3,8,128], index: 1, kind: input, shape index: {}]
  %s2 = inlined_call_operand.vmem [shape: f32[8,128], index: 2, kind: output, shape index: {}]
  %s3 = sld [smem:[#allocation0]]
  $region18: #{model_forward.1} parent=0
    _
  %s5 = ssub.s32 1, %s3
  %s6 = scalar_select 0, %s5, %s3
  // Predicated region
  $region2: #{model_forward.1} parent=0 // pred_check
    _
  $region3: #{model_forward.1} parent=0 // pred_check_branch
    %8 = sbr.rel (0) target = $region5
  $region4: #{model_forward.1} parent=0 // pred_region
    _
  $region5: #{model_forward.1} parent=0 // pred_fallthru
    _
  // Predicated region
  $region6: #{model_forward.1} parent=0 // pred_check
    _
  $region7: #{model_forward.1} parent=0 // pred_check_branch
    %10 = sbr.rel (0) target = $region9
  $region8: #{model_forward.1} parent=0 // pred_region
    _
  $region9: #{model_forward.1} parent=0 // pred_fallthru
    _
  %s11 = scalar_lea.vmem %s0, 16
  %v12 = vld [vmem:[%s11] sm:$0xff]
  %s13 = scalar_lea.vmem %s1, 16
  %v14 = vld [vmem:[%s13] sm:$0xff]
  %v15 = vadd.f32 %v12, %v14
  %v16 = vld [vmem:[%s0] sm:$0xff]
  %v17 = vld [vmem:[%s1] sm:$0xff]
  %v18 = vmul.f32 %v16, %v17
  %v19 = vadd.f32 %v15, %v18
  %s20 = scalar_lea.vmem %s0, 8
  %v21 = vld [vmem:[%s20] sm:$0xff]
  %s22 = scalar_lea.vmem %s1, 8
  %v23 = vld [vmem:[%s22] sm:$0xff]
  %v24 = vmul.f32 %v21, %v23
  %v25 = vadd.f32 %v19, %v24
  %26 = vst [vmem:[%s2] sm:$0xff] %v25
  // Predicated region
  $region10: #{model_forward.1} parent=0 // pred_check
    _
  $region11: #{model_forward.1} parent=0 // pred_check_branch
    %28 = sbr.rel (0) target = $region13
  $region12: #{model_forward.1} parent=0 // pred_region
    _
  $region13: #{model_forward.1} parent=0 // pred_fallthru
    _
  // Predicated region
  $region14: #{model_forward.1} parent=0 // pred_check
    _
  $region15: #{model_forward.1} parent=0 // pred_check_branch
    %30 = sbr.rel (0) target = $region17
  $region16: #{model_forward.1} parent=0 // pred_region
    _
  $region17: #{model_forward.1} parent=0 // pred_fallthru
    _

</llo_original>
